<compile_context>
chip_gen: v6e
topology: v6e:2x2x1
jax: 0.10.0
libtpu: 0.0.40
codegen_flags: <defaults>
</compile_context>

<pallas_src>
import jax
import jax.numpy as jnp
from jax.experimental import pallas as pl
from jax.experimental.pallas import tpu as pltpu


def _make_divisible(v, divisor, min_value=None):
    if min_value is None:
        min_value = divisor
    new_v = max(min_value, int(v + divisor / 2) // divisor * divisor)
    if new_v < 0.9 * v:
        new_v += divisor
    return new_v


def _pick_batch_block(n, per_sample_bytes, target_bytes=1 << 20, cap_bytes=8 << 20):
    """Samples per grid step: aim for >= ~1 MiB tiles (HBM-bound op), cap the
    tile at 8 MiB so input+output double-buffering (~4x tile) fits v7x's
    64 MiB VMEM, and prefer >= 2 grid steps (v7x megacore) when that does not
    drop the tile below the target size."""
    divisors = [d for d in range(1, n + 1) if n % d == 0]
    fits = [d for d in divisors if d * per_sample_bytes <= cap_bytes] or [1]
    bn = next((d for d in fits if d * per_sample_bytes >= target_bytes), fits[-1])
    if n // bn < 2:
        for d in reversed(fits):
            if d < bn and n // d >= 2 and d * per_sample_bytes >= target_bytes:
                bn = d
                break
    return bn


def _fc(a, w):
    """(Bn, K) x (K, M) fully-connected.  MXU matmul when the batch block is
    large enough to fill sublanes; tiny broadcast-multiply reduce otherwise."""
    if a.shape[0] >= 8:
        return jnp.dot(a, w, preferred_element_type=jnp.float32)
    return jnp.sum(a[:, :, None] * w[None, :, :], axis=1)


def _squeeze_excite_kernel(x_ref, w1t_ref, b1_ref, w2t_ref, b2_ref, o_ref):
    # x_ref: (Bn, C, HW) in the input's native dtype.  Weights are f32.
    hw = x_ref.shape[-1]
    inv_hw = jnp.float32(1.0 / hw)

    # Global average pool as a streaming f32 reduction (the cast fuses into the
    # reduce; no persistent f32 copy of the tile is kept live).
    pooled = jnp.sum(x_ref[...].astype(jnp.float32), axis=-1) * inv_hw     # (Bn, C)

    # conv_reduce (1x1) + ReLU:  h1 = relu(pooled @ w1^T + b1)
    h1 = _fc(pooled, w1t_ref[...]) + b1_ref[...]                           # (Bn, R)
    h1 = jnp.maximum(h1, 0.0)

    # conv_expand (1x1):  y2 = h1 @ w2^T + b2
    y2 = _fc(h1, w2t_ref[...]) + b2_ref[...]                               # (Bn, C)

    # gate_fn = h_sigmoid: relu6(t + 3) / 6
    gate = jnp.clip(y2 + 3.0, 0.0, 6.0) * jnp.float32(1.0 / 6.0)           # (Bn, C)

    # Channel-wise gating directly on the native-dtype data (no f32 staging).
    o_ref[...] = x_ref[...] * gate[:, :, None].astype(o_ref.dtype)


def squeeze_excite(x, w_reduce, b_reduce, w_expand, b_expand):
    """SqueezeExcite forward.

    x:        (N, C, H, W)
    w_reduce: (R, C)   conv_reduce weight (squeezed from (R, C, 1, 1))
    b_reduce: (R,)
    w_expand: (C, R)   conv_expand weight (squeezed from (C, R, 1, 1))
    b_expand: (C,)
    """
    N, C, H, W = x.shape
    R = w_reduce.shape[0]
    HW = H * W

    x3 = x.reshape(N, C, HW)                              # contiguous: no HBM copy
    w1t = jnp.transpose(w_reduce).astype(jnp.float32)     # (C, R)
    b1 = b_reduce.reshape(1, R).astype(jnp.float32)       # (1, R)
    w2t = jnp.transpose(w_expand).astype(jnp.float32)     # (R, C)
    b2 = b_expand.reshape(1, C).astype(jnp.float32)       # (1, C)

    itemsize = jnp.dtype(x.dtype).itemsize
    per_sample_bytes = C * HW * itemsize
    bn = _pick_batch_block(N, per_sample_bytes)
    grid = (N // bn,)

    # VMEM budget: input + output tiles, each double-buffered, plus the (tiny)
    # weights (also double-buffered by the pipeline) plus slack.  Clamp so the
    # request is valid on v5e/v6e (128 MiB physical) and v7x (64 MiB physical).
    tile_bytes = bn * per_sample_bytes
    weight_bytes = 4 * (w1t.size + b1.size + w2t.size + b2.size)
    vmem_needed = 4 * tile_bytes + 2 * weight_bytes + (2 << 20)
    vmem_limit = int(min(max(vmem_needed, 32 << 20), 56 << 20))

    out3 = pl.pallas_call(
        _squeeze_excite_kernel,
        out_shape=jax.ShapeDtypeStruct((N, C, HW), x.dtype),
        grid_spec=pltpu.PrefetchScalarGridSpec(
            num_scalar_prefetch=0,
            grid=grid,
            in_specs=[
                pl.BlockSpec((bn, C, HW), lambda n: (n, 0, 0)),  # Bn whole samples
                pl.BlockSpec((C, R), lambda n: (0, 0)),          # w1^T (constant)
                pl.BlockSpec((1, R), lambda n: (0, 0)),          # b1
                pl.BlockSpec((R, C), lambda n: (0, 0)),          # w2^T (constant)
                pl.BlockSpec((1, C), lambda n: (0, 0)),          # b2
            ],
            out_specs=pl.BlockSpec((bn, C, HW), lambda n: (n, 0, 0)),
        ),
        compiler_params=pltpu.CompilerParams(
            dimension_semantics=("parallel",),
            vmem_limit_bytes=vmem_limit,
        ),
    )(x3, w1t, b1, w2t, b2)

    return out3.reshape(N, C, H, W)


def squeeze_excite_ref(x, w_reduce, b_reduce, w_expand, b_expand):
    pooled = jnp.mean(x, axis=(2, 3), keepdims=True)                          # (N,C,1,1)
    se = jnp.einsum('nchw,rc->nrhw', pooled, w_reduce) + b_reduce.reshape(1, -1, 1, 1)
    se = jnp.maximum(se, 0.0)
    se = jnp.einsum('nrhw,cr->nchw', se, w_expand) + b_expand.reshape(1, -1, 1, 1)
    gate = jnp.clip(se + 3.0, 0.0, 6.0) / 6.0
    return x * gate


if __name__ == "__main__":
    key = jax.random.PRNGKey(0)
    k_x, k_w1, k_b1, k_w2, k_b2 = jax.random.split(key, 5)

    N, C, H, W = 2, 4, 16, 16
    se_ratio, divisor = 0.25, 8
    R = _make_divisible(C * se_ratio, divisor)   # reduced_chs (= 8 for in_chs=4)

    x = jax.random.normal(k_x, (N, C, H, W), dtype=jnp.float32) * 4.0
    w_reduce = jax.random.normal(k_w1, (R, C), dtype=jnp.float32) * 0.5
    b_reduce = jax.random.normal(k_b1, (R,), dtype=jnp.float32) * 0.1
    w_expand = jax.random.normal(k_w2, (C, R), dtype=jnp.float32) * 0.5
    b_expand = jax.random.normal(k_b2, (C,), dtype=jnp.float32) * 0.1

    y = squeeze_excite(x, w_reduce, b_reduce, w_expand, b_expand)
    y = jax.block_until_ready(y)

    y_ref = squeeze_excite_ref(x, w_reduce, b_reduce, w_expand, b_expand)
    assert y.shape == x.shape and y.dtype == x.dtype
    err = jnp.max(jnp.abs(y - y_ref))
    assert err < 1e-4, err

    print("KERNEL_OK")
</pallas_src>

<mosaic_0001>
module attributes {stable_mosaic.version = 11 : i64} {
  func.func @_squeeze_excite_kernel(%arg0: i32, %arg1: memref<2x4x256xf32, #tpu.memory_space<vmem>>, %arg2: memref<4x8xf32, #tpu.memory_space<vmem>>, %arg3: memref<1x8xf32, #tpu.memory_space<vmem>>, %arg4: memref<8x4xf32, #tpu.memory_space<vmem>>, %arg5: memref<1x4xf32, #tpu.memory_space<vmem>>, %arg6: memref<2x4x256xf32, #tpu.memory_space<vmem>>) attributes {dimension_semantics = [#tpu.dimension_semantics<parallel>], iteration_bounds = array<i64: 1>, scalar_prefetch = 0 : i64, scratch_operands = 0 : i64, tpu.core_type = #tpu.core_type<tc>, window_params = [{transform_indices = @transform_0, window_bounds = array<i64: 2, 4, 256>}, {pipeline_mode = #tpu.pipeline_mode<synchronous>, transform_indices = @transform_1, window_bounds = array<i64: 4, 8>}, {pipeline_mode = #tpu.pipeline_mode<synchronous>, transform_indices = @transform_2, window_bounds = array<i64: 1, 8>}, {pipeline_mode = #tpu.pipeline_mode<synchronous>, transform_indices = @transform_3, window_bounds = array<i64: 8, 4>}, {pipeline_mode = #tpu.pipeline_mode<synchronous>, transform_indices = @transform_4, window_bounds = array<i64: 1, 4>}, {transform_indices = @transform_5, window_bounds = array<i64: 2, 4, 256>}]} {
    %c0 = arith.constant 0 : index
    %c0_0 = arith.constant 0 : index
    %c0_1 = arith.constant 0 : index
    %0 = vector.load %arg1[%c0, %c0_0, %c0_1] : memref<2x4x256xf32, #tpu.memory_space<vmem>>, vector<2x4x256xf32>
    %cst = arith.constant dense<0.000000e+00> : vector<2x4xf32>
    %1 = vector.multi_reduction <add>, %0, %cst [2] : vector<2x4x256xf32> to vector<2x4xf32>
    %cst_2 = arith.constant 3.906250e-03 : f32
    %2 = vector.broadcast %cst_2 : f32 to vector<2x4xf32>
    %3 = arith.mulf %1, %2 : vector<2x4xf32>
    %c0_3 = arith.constant 0 : index
    %c0_4 = arith.constant 0 : index
    %4 = vector.load %arg2[%c0_3, %c0_4] : memref<4x8xf32, #tpu.memory_space<vmem>>, vector<4x8xf32>
    %5 = vector.shape_cast %3 : vector<2x4xf32> to vector<2x4x1xf32>
    %6 = vector.shape_cast %4 : vector<4x8xf32> to vector<1x4x8xf32>
    %7 = vector.broadcast %5 : vector<2x4x1xf32> to vector<2x4x8xf32>
    %8 = vector.broadcast %6 : vector<1x4x8xf32> to vector<2x4x8xf32>
    %9 = arith.mulf %7, %8 : vector<2x4x8xf32>
    %cst_5 = arith.constant dense<0.000000e+00> : vector<2x8xf32>
    %10 = vector.multi_reduction <add>, %9, %cst_5 [1] : vector<2x4x8xf32> to vector<2x8xf32>
    %c0_6 = arith.constant 0 : index
    %c0_7 = arith.constant 0 : index
    %11 = vector.load %arg3[%c0_6, %c0_7] : memref<1x8xf32, #tpu.memory_space<vmem>>, vector<1x8xf32>
    %12 = vector.broadcast %11 : vector<1x8xf32> to vector<2x8xf32>
    %13 = arith.addf %10, %12 : vector<2x8xf32>
    %cst_8 = arith.constant 0.000000e+00 : f32
    %14 = vector.broadcast %cst_8 : f32 to vector<2x8xf32>
    %15 = arith.maximumf %13, %14 : vector<2x8xf32>
    %c0_9 = arith.constant 0 : index
    %c0_10 = arith.constant 0 : index
    %16 = vector.load %arg4[%c0_9, %c0_10] : memref<8x4xf32, #tpu.memory_space<vmem>>, vector<8x4xf32>
    %17 = vector.shape_cast %15 : vector<2x8xf32> to vector<2x8x1xf32>
    %18 = vector.shape_cast %16 : vector<8x4xf32> to vector<1x8x4xf32>
    %19 = vector.broadcast %17 : vector<2x8x1xf32> to vector<2x8x4xf32>
    %20 = vector.broadcast %18 : vector<1x8x4xf32> to vector<2x8x4xf32>
    %21 = arith.mulf %19, %20 : vector<2x8x4xf32>
    %cst_11 = arith.constant dense<0.000000e+00> : vector<2x4xf32>
    %22 = vector.multi_reduction <add>, %21, %cst_11 [1] : vector<2x8x4xf32> to vector<2x4xf32>
    %c0_12 = arith.constant 0 : index
    %c0_13 = arith.constant 0 : index
    %23 = vector.load %arg5[%c0_12, %c0_13] : memref<1x4xf32, #tpu.memory_space<vmem>>, vector<1x4xf32>
    %24 = vector.broadcast %23 : vector<1x4xf32> to vector<2x4xf32>
    %25 = arith.addf %22, %24 : vector<2x4xf32>
    %cst_14 = arith.constant 3.000000e+00 : f32
    %26 = vector.broadcast %cst_14 : f32 to vector<2x4xf32>
    %27 = arith.addf %25, %26 : vector<2x4xf32>
    %cst_15 = arith.constant 0.000000e+00 : f32
    %cst_16 = arith.constant 6.000000e+00 : f32
    %28 = vector.broadcast %cst_15 : f32 to vector<2x4xf32>
    %29 = arith.maximumf %28, %27 : vector<2x4xf32>
    %30 = vector.broadcast %cst_16 : f32 to vector<2x4xf32>
    %31 = arith.minimumf %30, %29 : vector<2x4xf32>
    %cst_17 = arith.constant 0.166666672 : f32
    %32 = vector.broadcast %cst_17 : f32 to vector<2x4xf32>
    %33 = arith.mulf %31, %32 : vector<2x4xf32>
    %c0_18 = arith.constant 0 : index
    %c0_19 = arith.constant 0 : index
    %c0_20 = arith.constant 0 : index
    %34 = vector.load %arg1[%c0_18, %c0_19, %c0_20] : memref<2x4x256xf32, #tpu.memory_space<vmem>>, vector<2x4x256xf32>
    %35 = vector.shape_cast %33 : vector<2x4xf32> to vector<2x4x1xf32>
    %36 = vector.broadcast %35 : vector<2x4x1xf32> to vector<2x4x256xf32>
    %37 = arith.mulf %34, %36 : vector<2x4x256xf32>
    %c0_21 = arith.constant 0 : index
    %c0_22 = arith.constant 0 : index
    %c0_23 = arith.constant 0 : index
    %38 = vector.load %arg6[%c0_21, %c0_22, %c0_23] : memref<2x4x256xf32, #tpu.memory_space<vmem>>, vector<2x4x256xf32>
    tpu.vector_store %arg6[%c0_21, %c0_22, %c0_23], %37 {strides = array<i32>} : memref<2x4x256xf32, #tpu.memory_space<vmem>>, vector<2x4x256xf32>,
    return
  }
  func.func @transform_0(%arg0: i32) -> (i32, i32, i32) {
    %c0_i32 = arith.constant 0 : i32
    %c0_i32_0 = arith.constant 0 : i32
    %c0_i32_1 = arith.constant 0 : i32
    return %arg0, %c0_i32, %c0_i32_0 : i32, i32, i32
  }
  func.func @transform_1(%arg0: i32) -> (i32, i32) {
    %c0_i32 = arith.constant 0 : i32
    %c0_i32_0 = arith.constant 0 : i32
    %c0_i32_1 = arith.constant 0 : i32
    return %c0_i32, %c0_i32_0 : i32, i32
  }
  func.func @transform_2(%arg0: i32) -> (i32, i32) {
    %c0_i32 = arith.constant 0 : i32
    %c0_i32_0 = arith.constant 0 : i32
    %c0_i32_1 = arith.constant 0 : i32
    return %c0_i32, %c0_i32_0 : i32, i32
  }
  func.func @transform_3(%arg0: i32) -> (i32, i32) {
    %c0_i32 = arith.constant 0 : i32
    %c0_i32_0 = arith.constant 0 : i32
    %c0_i32_1 = arith.constant 0 : i32
    return %c0_i32, %c0_i32_0 : i32, i32
  }
  func.func @transform_4(%arg0: i32) -> (i32, i32) {
    %c0_i32 = arith.constant 0 : i32
    %c0_i32_0 = arith.constant 0 : i32
    %c0_i32_1 = arith.constant 0 : i32
    return %c0_i32, %c0_i32_0 : i32, i32
  }
  func.func @transform_5(%arg0: i32) -> (i32, i32, i32) {
    %c0_i32 = arith.constant 0 : i32
    %c0_i32_0 = arith.constant 0 : i32
    %c0_i32_1 = arith.constant 0 : i32
    return %arg0, %c0_i32, %c0_i32_0 : i32, i32, i32
  }
}

</mosaic_0001>

<llo_original>
// kernel: tpu_custom_call.1
$region0: #{tpu_custom_call.1}
  #allocation0 [shape = 'u32[]', space=smem, size = 0x4, offset = 0x4, fixed_abs, tag = 'smem constant byte address 0x4 - core index']
  #allocation1 [shape = 'u32[144,128]{1,0:T(1,128)}', space=vmem, size = 0x12000, scoped, tag = 'internal scratch']
  %s0 = inlined_call_operand.hbm [shape: f32[2,4,256], index: 0, kind: input, shape index: {}]
  %s1 = inlined_call_operand.vmem [shape: f32[4,8], index: 1, kind: input, shape index: {}]
  %s2 = inlined_call_operand.vmem [shape: f32[1,8], index: 2, kind: input, shape index: {}]
  %s3 = inlined_call_operand.vmem [shape: f32[8,4], index: 3, kind: input, shape index: {}]
  %s4 = inlined_call_operand.vmem [shape: f32[1,4], index: 4, kind: input, shape index: {}]
  %s5 = inlined_call_operand.hbm [shape: f32[2,4,256], index: 5, kind: output, shape index: {}]
  %s6 = sld [smem:[#allocation0]]
  $region34: #{tpu_custom_call.1} parent=0
    _
  %s8 = ssub.s32 1, %s6
  %s9 = scalar_select 0, %s8, %s6
  $region1: #{tpu_custom_call.1} parent=0
    #allocation2 [shape = 'u8[8192]{0}', space=vmem, size = 0x2000, scoped, tag = 'input window, operand 0, single buffered']
    #allocation3 [shape = 's32[1]{0}', space=sflag, size = 0x4, scoped, tag = 'scoped memory for tpu_custom_call.1']
    #allocation4 [shape = 's32[1]{0}', space=sflag, size = 0x4, scoped, tag = 'scoped memory for tpu_custom_call.1']
    #allocation5 [shape = 'u8[8192]{0}', space=vmem, size = 0x2000, scoped, tag = 'output window, operand 0, single buffered']
    %10 = vsyncpa [#allocation3], 0
    %11 = vsyncpa [#allocation4], 0
    // Predicated region
    $region2: #{tpu_custom_call.1} parent=1 // pred_check
      _
    $region3: #{tpu_custom_call.1} parent=1 // pred_check_branch
      %13 = sbr.rel (0) target = $region5
    $region4: #{tpu_custom_call.1} parent=1 // pred_region
      %s15 = ssub.s32 256, 256
      %16 = vsyncadd [#allocation3], %s15
      %s17 = sshll.u32 [#allocation2], 4
      %s18 = int_to_ptr.vmem [resolvable:$true] %s17
      %23 = dma.hbm_to_vmem [thread:$0]  %s0, 256, %s18, [#allocation3], 128, 128, 8
    $region5: #{tpu_custom_call.1} parent=1 // pred_fallthru
      _
    // Predicated region
    $region6: #{tpu_custom_call.1} parent=1 // pred_check
      _
    $region7: #{tpu_custom_call.1} parent=1 // pred_check_branch
      %25 = sbr.rel (0) target = $region9
    $region8: #{tpu_custom_call.1} parent=1 // pred_region
      _
    $region9: #{tpu_custom_call.1} parent=1 // pred_fallthru
      _
    // Predicated region
    $region10: #{tpu_custom_call.1} parent=1 // pred_check
      _
    $region11: #{tpu_custom_call.1} parent=1 // pred_check_branch
      %27 = sbr.rel (0) target = $region13
    $region12: #{tpu_custom_call.1} parent=1 // pred_region
      _
    $region13: #{tpu_custom_call.1} parent=1 // pred_fallthru
      _
    // Predicated region
    $region14: #{tpu_custom_call.1} parent=1 // pred_check
      _
    $region15: #{tpu_custom_call.1} parent=1 // pred_check_branch
      %29 = sbr.rel (0) target = $region17
    $region16: #{tpu_custom_call.1} parent=1 // pred_region
      _
    $region17: #{tpu_custom_call.1} parent=1 // pred_fallthru
      _
    // Predicated region
    $region18: #{tpu_custom_call.1} parent=1 // pred_check
      _
    $region19: #{tpu_custom_call.1} parent=1 // pred_check_branch
      %31 = sbr.rel (0) target = $region21
    $region20: #{tpu_custom_call.1} parent=1 // pred_region
      _
    $region21: #{tpu_custom_call.1} parent=1 // pred_fallthru
      _
    // Predicated region
    $region22: #{tpu_custom_call.1} parent=1 // pred_check
      _
    $region23: #{tpu_custom_call.1} parent=1 // pred_check_branch
      %33 = sbr.rel (0) target = $region25
    $region24: #{tpu_custom_call.1} parent=1 // pred_region
      %34 = dma.done [#allocation3], 256
    $region25: #{tpu_custom_call.1} parent=1 // pred_fallthru
      _
    %v35 = vld [vmem:[#allocation2] sm:$0xff]
    %v36 = vld [vmem:[#allocation2 + $0x8] sm:$0xff]
    %v39 = vcombine.high %v35, %v35
    %v40 = vcombine.high %v36, %v36
    %vm43 = vcmask 1043456
    %v44 = vsel %vm43, %v35, 0.0
    %v45 = vsel %vm43, %v39, 0.0
    %v46 = vadd.f32 %v44, %v45
    %47 = vadd.xlane.f32.xlu0 %v46
    %v48 = vpop.xlane.xlu0 %47
    %v49 = vsel %vm43, %v36, 0.0
    %v50 = vsel %vm43, %v40, 0.0
    %v51 = vadd.f32 %v49, %v50
    %52 = vadd.xlane.f32.xlu0 %v51
    %v53 = vpop.xlane.xlu0 %52
    %v54 = vmul.f32 %v48, 0.00390625
    %v55 = vmul.f32 %v53, 0.00390625
    %v56 = vld [vmem:[%s1] sm:$0xf]
    %v57 = vmul.f32 %v54, %v56
    %v58 = vmul.f32 %v55, %v56
    %vm59 = vcmask 60416
    %v60 = vsel %vm59, %v57, 0.0
    %v61 = vrot.slane %v60, 4
    %v62 = vadd.f32 %v60, %v61
    %v63 = vrot.slane %v62, 2
    %v64 = vadd.f32 %v62, %v63
    %v65 = vrot.slane %v64, 1
    %v66 = vadd.f32 %v64, %v65
    %v67 = vsel %vm59, %v58, 0.0
    %v68 = vrot.slane %v67, 4
    %v69 = vadd.f32 %v67, %v68
    %v70 = vrot.slane %v69, 2
    %v71 = vadd.f32 %v69, %v70
    %v72 = vrot.slane %v71, 1
    %v73 = vadd.f32 %v71, %v72
    %v74 = vld [vmem:[%s2] sm:$0x1]
    %v76 = vlaneseq
    %v77 = vshrl.u32 %v76, 7
    %v78 = vsub.s32 0, %v77
    %v79 = vrot.slane %v74, %v78
    %v81 = vadd.f32 %v66, %v79
    %v82 = vadd.f32 %v73, %v79
    %v83 = vmax.f32 %v81, 0.0
    %v84 = vmax.f32 %v82, 0.0
    %v85 = vld [vmem:[%s3] sm:$0xff]
    %v86 = vlaneseq
    %v87 = vshrl.u32 %v86, 7
    %v88 = vsub.s32 0, %v87
    %v89 = vrot.slane %v83, %v88
    %91 = vbcast.lane.b32.xlu0 %v89, 256
    %v92 = vpop.permute.xlu0 %91
    %v93 = vlaneseq
    %v94 = vshrl.u32 %v93, 7
    %v95 = vsub.s32 0, %v94
    %v96 = vrot.slane %v84, %v95
    %98 = vbcast.lane.b32.xlu0 %v96, 256
    %v99 = vpop.permute.xlu0 %98
    %v100 = vmul.f32 %v92, %v85
    %v101 = vmul.f32 %v99, %v85
    %vm102 = vcmask 31744
    %v103 = vsel %vm102, %v100, 0.0
    %v104 = vrot.slane %v103, 4
    %v105 = vadd.f32 %v103, %v104
    %v106 = vrot.slane %v105, 2
    %v107 = vadd.f32 %v105, %v106
    %v108 = vrot.slane %v107, 1
    %v109 = vadd.f32 %v107, %v108
    %v110 = vsel %vm102, %v101, 0.0
    %v111 = vrot.slane %v110, 4
    %v112 = vadd.f32 %v110, %v111
    %v113 = vrot.slane %v112, 2
    %v114 = vadd.f32 %v112, %v113
    %v115 = vrot.slane %v114, 1
    %v116 = vadd.f32 %v114, %v115
    %v117 = vld [vmem:[%s4] sm:$0x1]
    %v119 = vlaneseq
    %v120 = vshrl.u32 %v119, 7
    %v121 = vsub.s32 0, %v120
    %v122 = vrot.slane %v117, %v121
    %v124 = vadd.f32 %v109, %v122
    %v125 = vadd.f32 %v116, %v122
    %v126 = vadd.f32 %v124, 3.0
    %v127 = vadd.f32 %v125, 3.0
    %v128 = vmax.f32 %v126, 0.0
    %v129 = vmax.f32 %v127, 0.0
    %v130 = vmin.f32 %v128, 6.0
    %v131 = vmin.f32 %v129, 6.0
    %v132 = vmul.f32 %v130, 0.16666667
    %v133 = vmul.f32 %v131, 0.16666667
    %v134 = vlaneseq
    %v135 = vshrl.u32 %v134, 7
    %v136 = vsub.s32 0, %v135
    %v137 = vrot.slane %v132, %v136
    %139 = vbcast.lane.b32.xlu0 %v137, 256
    %v140 = vpop.permute.xlu0 %139
    %v141 = vlaneseq
    %v142 = vshrl.u32 %v141, 7
    %v143 = vsub.s32 0, %v142
    %v144 = vrot.slane %v133, %v143
    %146 = vbcast.lane.b32.xlu0 %v144, 256
    %v147 = vpop.permute.xlu0 %146
    %v151 = vunpack.c.l.s4 839922192
    %v152 = vunpack.c.0.s8 %v151
    %v153 = vlaneseq
    %v154 = vshrl.u32 %v153, 7
    %v155 = vsub.s32 %v152, %v154
    %v156 = vrot.slane %v140, %v155
    %v158 = vunpack.c.l.s4 839922192
    %v159 = vunpack.c.0.s8 %v158
    %v160 = vlaneseq
    %v161 = vshrl.u32 %v160, 7
    %v162 = vsub.s32 %v159, %v161
    %v163 = vrot.slane %v147, %v162
    %v166 = vmul.f32 %v35, %v156
    %v167 = vmul.f32 %v36, %v163
    %168 = vst [vmem:[#allocation5] sm:$0xff] %v166
    %169 = vst [vmem:[#allocation5 + $0x8] sm:$0xff] %v167
    // Predicated region
    $region26: #{tpu_custom_call.1} parent=1 // pred_check
      _
    $region27: #{tpu_custom_call.1} parent=1 // pred_check_branch
      %171 = sbr.rel (0) target = $region29
    $region28: #{tpu_custom_call.1} parent=1 // pred_region
      %s173 = ssub.s32 256, 256
      %174 = vsyncadd [#allocation4], %s173
      %s175 = sshll.u32 [#allocation5], 4
      %s176 = int_to_ptr.vmem [resolvable:$true] %s175
      %181 = dma.vmem_to_hbm [thread:$0]  %s176, 256, %s5, [#allocation4], 128, 128, 8
    $region29: #{tpu_custom_call.1} parent=1 // pred_fallthru
      _
    // Predicated region
    $region30: #{tpu_custom_call.1} parent=1 // pred_check
      _
    $region31: #{tpu_custom_call.1} parent=1 // pred_check_branch
      %183 = sbr.rel (0) target = $region33
    $region32: #{tpu_custom_call.1} parent=1 // pred_region
      %184 = dma.done [#allocation4], 256
    $region33: #{tpu_custom_call.1} parent=1 // pred_fallthru
      _
    %185 = vsyncpa [#allocation3], 1
    %186 = vsyncpa [#allocation4], 1

</llo_original>
